<compile_context>
chip_gen: v6e
topology: v6e:2x2x1
jax: 0.10.0
libtpu: 0.0.40
codegen_flags: <defaults>
</compile_context>

<pallas_src>
import functools

import jax
import jax.numpy as jnp
from jax.experimental import pallas as pl
from jax.experimental.pallas import tpu as pltpu

_EPS = 1e-7
_LANE = 128                      # vreg lane width


def _round_up(x, m):
    return -(-x // m) * m


def _round_down(x, m):
    return (x // m) * m


def _sublane_multiple(*dtypes):
    # Native sublane tiling: 8 for 32-bit, 16 for bf16, 32 for 8-bit types.
    min_itemsize = min(jnp.dtype(d).itemsize for d in dtypes)
    return 8 * max(1, 4 // min_itemsize)


def _chip_budget():
    """(target_block_bytes, vmem_cap_bytes) keyed on the TPU generation."""
    kind = ""
    try:
        kind = jax.devices()[0].device_kind.lower()
    except Exception:
        pass
    if "v5" in kind:
        # ~0.8 TB/s: a 4 MiB step is ~5 us, per-step overhead <7% already.
        return 4 << 20, 96 << 20
    if "v6" in kind:
        # 128 MiB VMEM, ~1.4 TB/s: slightly larger steps are free.
        return 12 << 20, 96 << 20
    # v7x (3.2 TB/s, only 64 MiB VMEM) or unknown: big steps, tight cap.
    return 16 << 20, 40 << 20


def _choose_tiles(n_rows, n_cols, bytes_per_elem, sub, target_block_bytes):
    """Pick (tile_n, tile_c) so one grid step moves ~target_block_bytes of
    input data (lane-padded), with block dims that satisfy the (sublane, 128)
    layout rule (multiple of the hardware tile, or the full array dim)."""
    padded_c = _round_up(n_cols, _LANE)
    if sub * padded_c * bytes_per_elem > target_block_bytes:
        # Vocab-sized class axis: tile C (cdiv + mask handles any C).
        tile_n = sub if n_rows >= sub else n_rows
        tile_c = max(_LANE, _round_down(
            target_block_bytes // max(1, tile_n * bytes_per_elem), _LANE))
        if tile_c >= n_cols:
            tile_c = n_cols
    else:
        tile_c = n_cols
        ideal_n = max(sub, _round_down(
            target_block_bytes // max(1, padded_c * bytes_per_elem), sub))
        tile_n = n_rows if n_rows <= ideal_n else ideal_n
        # v7x megacore: keep >= 2 programs on the "parallel" row axis.
        if tile_n >= n_rows and n_rows >= 2 * sub:
            tile_n = _round_up(-(-n_rows // 2), sub)
    return tile_n, tile_c


def _vmem_limit(tile_n, tile_c, in_itemsizes, sub, cap):
    """Budget: double-buffered input blocks + ~3 f32 blocks of in-kernel
    temporaries (upcast x/t, y, masks) + accumulators + slack."""
    pn = _round_up(max(tile_n, sub), sub)
    pc = _round_up(tile_c, _LANE)
    blk_in = sum(pn * pc * int(it) for it in in_itemsizes)
    blk_f32 = pn * pc * 4
    need = 2 * blk_in + 3 * blk_f32
    need += 8 * pc * 4 + pn * _LANE * 4      # dense / sparse accumulators
    need += 2 << 20                          # out blocks, semaphores, slack
    return int(min(cap, max(32 << 20, need)))


# ----------------------------------------------------------------------------
# Dense (one-hot / soft targets) path — matches the module interface exactly.
# ----------------------------------------------------------------------------
def _ce_dense_kernel(x_ref, t_ref, out_ref, acc_ref, *, n_rows, n_cols,
                     tile_n, tile_c, mask_rows, mask_cols):
    """Grid = (row tiles, class tiles).  acc_ref is an (8, tile_c) f32 VMEM
    scratch accumulating lane-wise partials of targets * log(clip(inputs));
    at the last class tile it is reduced to one scalar per row tile."""
    i = pl.program_id(0)
    j = pl.program_id(1)

    @pl.when(j == 0)
    def _():
        acc_ref[...] = jnp.zeros_like(acc_ref)

    # Upcast (bf16 inputs allowed); compute in f32 (v5e has no bf16 VPU/EUP).
    x = jnp.clip(x_ref[...].astype(jnp.float32), _EPS, 1.0 - _EPS)
    t = t_ref[...].astype(jnp.float32)
    y = t * jnp.log(x)                               # VPU mul + EUP log

    # Ragged last tiles: rank-reduced iota masks, applied as selects on y
    # (select discards any NaN/Inf coming from OOB-padded garbage).
    if mask_rows:
        rows = jax.lax.broadcasted_iota(jnp.int32, (tile_n, 1), 0)
        y = jnp.where(rows + i * tile_n < n_rows, y, 0.0)
    if mask_cols:
        cols = jax.lax.broadcasted_iota(jnp.int32, (1, tile_c), 1)
        y = jnp.where(cols + j * tile_c < n_cols, y, 0.0)

    if tile_n % 8 == 0:
        # Fold rows 8-at-a-time: layout-free reshape + pure VPU vreg adds.
        acc_ref[...] += jnp.sum(y.reshape(tile_n // 8, 8, tile_c), axis=0)
    else:
        # Small / odd batch fallback (single full-batch row block).
        acc_ref[0:1, :] += jnp.sum(y, axis=0, keepdims=True)

    @pl.when(j == pl.num_programs(1) - 1)
    def _():
        # One XLU lane-reduce + sublane-reduce per row tile -> scalar output.
        s = jnp.sum(acc_ref[...], axis=1, keepdims=True)   # (8, 1)
        s = jnp.sum(s, axis=0, keepdims=True)              # (1, 1)
        out_ref[...] = s[None]                             # (1, 1, 1)


def custom_cross_entropy_loss(inputs, targets, *, tile_n=None, tile_c=None,
                              target_block_bytes=None):
    """Pallas equivalent of CustomCrossEntropyLoss.forward for (N, C) arrays."""
    assert inputs.ndim == 2 and inputs.shape == targets.shape
    n_rows, n_cols = inputs.shape

    tgt_bytes, vmem_cap = _chip_budget()
    if target_block_bytes is not None:
        tgt_bytes = int(target_block_bytes)

    sub = _sublane_multiple(inputs.dtype, targets.dtype)
    itemsizes = (jnp.dtype(inputs.dtype).itemsize,
                 jnp.dtype(targets.dtype).itemsize)
    auto_n, auto_c = _choose_tiles(n_rows, n_cols, sum(itemsizes), sub, tgt_bytes)
    tile_n = auto_n if tile_n is None else min(int(tile_n), n_rows)
    tile_c = auto_c if tile_c is None else min(int(tile_c), n_cols)
    assert tile_n == n_rows or tile_n % sub == 0, "tile_n must be a sublane multiple"
    assert tile_c == n_cols or tile_c % _LANE == 0, "tile_c must be a multiple of 128"

    grid = (pl.cdiv(n_rows, tile_n), pl.cdiv(n_cols, tile_c))
    mask_rows = n_rows % tile_n != 0
    mask_cols = n_cols % tile_c != 0
    vmem_limit = _vmem_limit(tile_n, tile_c, itemsizes, sub, vmem_cap)

    kernel = functools.partial(
        _ce_dense_kernel, n_rows=n_rows, n_cols=n_cols, tile_n=tile_n,
        tile_c=tile_c, mask_rows=mask_rows, mask_cols=mask_cols)

    partials = pl.pallas_call(
        kernel,
        out_shape=jax.ShapeDtypeStruct((grid[0], 1, 1), jnp.float32),
        grid_spec=pltpu.PrefetchScalarGridSpec(
            num_scalar_prefetch=0,
            grid=grid,
            in_specs=[
                pl.BlockSpec((tile_n, tile_c), lambda i, j: (i, j)),
                pl.BlockSpec((tile_n, tile_c), lambda i, j: (i, j)),
            ],
            # Same (scalar) block for every j -> resident per-row-tile output.
            out_specs=pl.BlockSpec((1, 1, 1), lambda i, j: (i, 0, 0)),
            scratch_shapes=[pltpu.VMEM((8, tile_c), jnp.float32)],
        ),
        compiler_params=pltpu.CompilerParams(
            # Row tiles independent ("parallel" -> v7x megacore split);
            # class axis is the in-kernel reduction ("arbitrary", last).
            dimension_semantics=("parallel", "arbitrary"),
            vmem_limit_bytes=vmem_limit,
        ),
    )(inputs, targets)

    # Tiny epilogue in XLA: sum of grid[0] scalars, negate, mean.
    return -jnp.sum(partials) / n_rows


# ----------------------------------------------------------------------------
# Sparse-label path (integer class ids) — alternate entry point that halves
# HBM traffic (no dense one-hot stream) and does one log per row, not per
# element.  Semantically identical to the dense path when targets are one-hot.
# ----------------------------------------------------------------------------
def _ce_sparse_kernel(x_ref, lab_ref, out_ref, acc_ref, *, n_rows, n_cols,
                      tile_n, tile_c, mask_rows):
    i = pl.program_id(0)
    j = pl.program_id(1)

    @pl.when(j == 0)
    def _():
        acc_ref[...] = jnp.zeros_like(acc_ref)

    x = x_ref[...].astype(jnp.float32)
    cols = jax.lax.broadcasted_iota(jnp.int32, (tile_n, tile_c), 1) + j * tile_c
    sel = cols == lab_ref[...]                       # (tile_n,1) broadcast over lanes
    # Accumulate the selected probability per row across class tiles.
    acc_ref[...] += jnp.sum(jnp.where(sel, x, 0.0), axis=1, keepdims=True)

    @pl.when(j == pl.num_programs(1) - 1)
    def _():
        p = jnp.clip(acc_ref[...], _EPS, 1.0 - _EPS)
        loss = -jnp.log(p)                           # one EUP log per row
        if mask_rows:
            rows = jax.lax.broadcasted_iota(jnp.int32, (tile_n, 1), 0)
            loss = jnp.where(rows + i * tile_n < n_rows, loss, 0.0)
        out_ref[...] = jnp.sum(loss, axis=0, keepdims=True)[None]   # (1,1,1)


def custom_cross_entropy_loss_sparse(inputs, labels, *, tile_n=None,
                                     tile_c=None, target_block_bytes=None):
    """Same loss as custom_cross_entropy_loss with one-hot(labels) targets,
    but streams only `inputs` from HBM (labels are a tiny int32 column)."""
    assert inputs.ndim == 2 and labels.shape == (inputs.shape[0],)
    n_rows, n_cols = inputs.shape

    tgt_bytes, vmem_cap = _chip_budget()
    if target_block_bytes is not None:
        tgt_bytes = int(target_block_bytes)

    sub = _sublane_multiple(inputs.dtype)
    x_item = jnp.dtype(inputs.dtype).itemsize
    auto_n, auto_c = _choose_tiles(n_rows, n_cols, x_item, sub, tgt_bytes)
    tile_n = auto_n if tile_n is None else min(int(tile_n), n_rows)
    tile_c = auto_c if tile_c is None else min(int(tile_c), n_cols)
    assert tile_n == n_rows or tile_n % sub == 0, "tile_n must be a sublane multiple"
    assert tile_c == n_cols or tile_c % _LANE == 0, "tile_c must be a multiple of 128"

    grid = (pl.cdiv(n_rows, tile_n), pl.cdiv(n_cols, tile_c))
    mask_rows = n_rows % tile_n != 0
    vmem_limit = _vmem_limit(tile_n, tile_c, (x_item,), sub, vmem_cap)

    labels2 = labels.reshape(n_rows, 1).astype(jnp.int32)

    kernel = functools.partial(
        _ce_sparse_kernel, n_rows=n_rows, n_cols=n_cols, tile_n=tile_n,
        tile_c=tile_c, mask_rows=mask_rows)

    partials = pl.pallas_call(
        kernel,
        out_shape=jax.ShapeDtypeStruct((grid[0], 1, 1), jnp.float32),
        grid_spec=pltpu.PrefetchScalarGridSpec(
            num_scalar_prefetch=0,
            grid=grid,
            in_specs=[
                pl.BlockSpec((tile_n, tile_c), lambda i, j: (i, j)),
                pl.BlockSpec((tile_n, 1), lambda i, j: (i, 0)),
            ],
            out_specs=pl.BlockSpec((1, 1, 1), lambda i, j: (i, 0, 0)),
            scratch_shapes=[pltpu.VMEM((tile_n, 1), jnp.float32)],
        ),
        compiler_params=pltpu.CompilerParams(
            dimension_semantics=("parallel", "arbitrary"),
            vmem_limit_bytes=vmem_limit,
        ),
    )(inputs, labels2)

    return jnp.sum(partials) / n_rows


def reference_loss(inputs, targets):
    x = jnp.clip(inputs.astype(jnp.float32), _EPS, 1.0 - _EPS)
    t = targets.astype(jnp.float32)
    return jnp.mean(-jnp.sum(t * jnp.log(x), axis=1))


if __name__ == "__main__":
    def make_case(case_key, n, c, dtype):
        k1, k2 = jax.random.split(case_key)
        logits = jax.random.normal(k1, (n, c), dtype=jnp.float32)
        probs = jax.nn.softmax(logits, axis=1).astype(dtype)    # values in (0, 1)
        labels = jax.random.randint(k2, (n,), 0, c)
        onehot = jax.nn.one_hot(labels, c, dtype=dtype)
        return probs, onehot, labels

    key = jax.random.PRNGKey(0)
    cases = [
        # (name, N, C, dtype, tile overrides to exercise the interesting paths)
        ("f32_aligned",     64, 128, jnp.float32, {}),
        ("f32_ragged_rows", 40, 128, jnp.float32, dict(tile_n=16)),
        ("bf16_col_tiled",  16, 384, jnp.bfloat16, dict(tile_c=128)),
        ("f32_ragged_cols", 24, 300, jnp.float32, dict(tile_c=128)),
    ]
    for name, n, c, dtype, tiles in cases:
        key, case_key = jax.random.split(key)
        probs, onehot, labels = make_case(case_key, n, c, dtype)
        ref = reference_loss(probs, onehot)

        loss = jax.block_until_ready(custom_cross_entropy_loss(probs, onehot, **tiles))
        assert jnp.allclose(loss, ref, rtol=1e-5, atol=1e-5), (name, loss, ref)

        sparse = jax.block_until_ready(
            custom_cross_entropy_loss_sparse(probs, labels, **tiles))
        assert jnp.allclose(sparse, ref, rtol=1e-5, atol=1e-5), (name + "_sparse", sparse, ref)

    print("KERNEL_OK")
</pallas_src>

<mosaic_0001>
module attributes {stable_mosaic.version = 11 : i64} {
  func.func @_ce_dense_kernel(%arg0: i32, %arg1: i32, %arg2: memref<32x128xf32, #tpu.memory_space<vmem>>, %arg3: memref<32x128xf32, #tpu.memory_space<vmem>>, %arg4: memref<1x1x1xf32, #tpu.memory_space<vmem>>, %arg5: memref<8x128xf32, #tpu.memory_space<vmem>>) attributes {dimension_semantics = [#tpu.dimension_semantics<parallel>, #tpu.dimension_semantics<arbitrary>], iteration_bounds = array<i64: 2, 1>, scalar_prefetch = 0 : i64, scratch_operands = 1 : i64, tpu.core_type = #tpu.core_type<tc>, window_params = [{transform_indices = @transform_0, window_bounds = array<i64: 32, 128>}, {transform_indices = @transform_1, window_bounds = array<i64: 32, 128>}, {transform_indices = @transform_2, window_bounds = array<i64: 1, 1, 1>}]} {
    %c0_i32 = arith.constant 0 : i32
    %0 = arith.cmpi eq, %arg1, %c0_i32 : i32
    %1 = arith.extui %0 : i1 to i32
    %c0_i32_0 = arith.constant 0 : i32
    %2 = arith.cmpi ne, %1, %c0_i32_0 : i32
    scf.if %2 {
      %cst_12 = arith.constant 0.000000e+00 : f32
      %19 = vector.broadcast %cst_12 : f32 to vector<8x128xf32>
      %c0_13 = arith.constant 0 : index
      %c0_14 = arith.constant 0 : index
      %20 = vector.load %arg5[%c0_13, %c0_14] : memref<8x128xf32, #tpu.memory_space<vmem>>, vector<8x128xf32>
      tpu.vector_store %arg5[%c0_13, %c0_14], %19 {strides = array<i32>} : memref<8x128xf32, #tpu.memory_space<vmem>>, vector<8x128xf32>,
    } else {
    }
    %c0 = arith.constant 0 : index
    %c0_1 = arith.constant 0 : index
    %3 = vector.load %arg2[%c0, %c0_1] : memref<32x128xf32, #tpu.memory_space<vmem>>, vector<32x128xf32>
    %cst = arith.constant 1.000000e-07 : f32
    %cst_2 = arith.constant 0.99999988 : f32
    %4 = vector.broadcast %cst : f32 to vector<32x128xf32>
    %5 = arith.maximumf %4, %3 : vector<32x128xf32>
    %6 = vector.broadcast %cst_2 : f32 to vector<32x128xf32>
    %7 = arith.minimumf %6, %5 : vector<32x128xf32>
    %c0_3 = arith.constant 0 : index
    %c0_4 = arith.constant 0 : index
    %8 = vector.load %arg3[%c0_3, %c0_4] : memref<32x128xf32, #tpu.memory_space<vmem>>, vector<32x128xf32>
    %9 = math.log %7 : vector<32x128xf32>
    %10 = arith.mulf %8, %9 : vector<32x128xf32>
    %c0_5 = arith.constant 0 : index
    %c0_6 = arith.constant 0 : index
    %11 = vector.load %arg5[%c0_5, %c0_6] : memref<8x128xf32, #tpu.memory_space<vmem>>, vector<8x128xf32>
    %12 = vector.shape_cast %10 : vector<32x128xf32> to vector<4x8x128xf32>
    %cst_7 = arith.constant dense<0.000000e+00> : vector<8x128xf32>
    %13 = vector.multi_reduction <add>, %12, %cst_7 [0] : vector<4x8x128xf32> to vector<8x128xf32>
    %14 = arith.addf %11, %13 : vector<8x128xf32>
    %c0_8 = arith.constant 0 : index
    %c0_9 = arith.constant 0 : index
    %15 = vector.load %arg5[%c0_8, %c0_9] : memref<8x128xf32, #tpu.memory_space<vmem>>, vector<8x128xf32>
    tpu.vector_store %arg5[%c0_8, %c0_9], %14 {strides = array<i32>} : memref<8x128xf32, #tpu.memory_space<vmem>>, vector<8x128xf32>,
    %c0_i32_10 = arith.constant 0 : i32
    %16 = arith.cmpi eq, %arg1, %c0_i32_10 : i32
    %17 = arith.extui %16 : i1 to i32
    %c0_i32_11 = arith.constant 0 : i32
    %18 = arith.cmpi ne, %17, %c0_i32_11 : i32
    scf.if %18 {
      %c0_12 = arith.constant 0 : index
      %c0_13 = arith.constant 0 : index
      %19 = vector.load %arg5[%c0_12, %c0_13] : memref<8x128xf32, #tpu.memory_space<vmem>>, vector<8x128xf32>
      %cst_14 = arith.constant dense<0.000000e+00> : vector<8xf32>
      %20 = vector.multi_reduction <add>, %19, %cst_14 [1] : vector<8x128xf32> to vector<8xf32>
      %21 = vector.shape_cast %20 : vector<8xf32> to vector<8x1xf32>
      %cst_15 = arith.constant dense<0.000000e+00> : vector<1xf32>
      %22 = vector.multi_reduction <add>, %21, %cst_15 [0] : vector<8x1xf32> to vector<1xf32>
      %23 = vector.shape_cast %22 : vector<1xf32> to vector<1x1xf32>
      %24 = vector.shape_cast %23 : vector<1x1xf32> to vector<1x1x1xf32>
      %c0_16 = arith.constant 0 : index
      %c0_17 = arith.constant 0 : index
      %c0_18 = arith.constant 0 : index
      %25 = vector.load %arg4[%c0_16, %c0_17, %c0_18] : memref<1x1x1xf32, #tpu.memory_space<vmem>>, vector<1x1x1xf32>
      tpu.vector_store %arg4[%c0_16, %c0_17, %c0_18], %24 {strides = array<i32>} : memref<1x1x1xf32, #tpu.memory_space<vmem>>, vector<1x1x1xf32>,
    } else {
    }
    return
  }
  func.func @transform_0(%arg0: i32, %arg1: i32) -> (i32, i32) {
    %c0_i32 = arith.constant 0 : i32
    return %arg0, %arg1 : i32, i32
  }
  func.func @transform_1(%arg0: i32, %arg1: i32) -> (i32, i32) {
    %c0_i32 = arith.constant 0 : i32
    return %arg0, %arg1 : i32, i32
  }
  func.func @transform_2(%arg0: i32, %arg1: i32) -> (i32, i32, i32) {
    %c0_i32 = arith.constant 0 : i32
    %c0_i32_0 = arith.constant 0 : i32
    %c0_i32_1 = arith.constant 0 : i32
    return %arg0, %c0_i32, %c0_i32_0 : i32, i32, i32
  }
}

</mosaic_0001>

<llo_original>
// kernel: tpu_custom_call.1
$region0: #{tpu_custom_call.1}
  #allocation0 [shape = 'u32[]', space=smem, size = 0x4, offset = 0x4, fixed_abs, tag = 'smem constant byte address 0x4 - core index']
  #allocation1 [shape = 'u32[144,128]{1,0:T(1,128)}', space=vmem, size = 0x12000, scoped, tag = 'internal scratch']
  #allocation2 [shape = 'f32[8,128]{1,0:T(8,128)}', space=vmem, size = 0x1000, scoped, tag = 'scratch operand']
  %s0 = inlined_call_operand.hbm [shape: f32[64,128], index: 0, kind: input, shape index: {}]
  %s1 = inlined_call_operand.hbm [shape: f32[64,128], index: 1, kind: input, shape index: {}]
  %s2 = inlined_call_operand.vmem [shape: f32[2,1,1], index: 2, kind: output, shape index: {}]
  %s3 = sld [smem:[#allocation0]]
  $region57: #{tpu_custom_call.1} parent=0
    _
  %s5 = ssub.s32 1, %s3
  %s6 = scalar_select 0, %s5, %s3
  $region1: #{tpu_custom_call.1} parent=0
    #allocation3 [shape = 'u8[32768]{0}', space=vmem, size = 0x8000, scoped, tag = 'input window, operand 0']
    #allocation4 [shape = 's32[2]{0}', space=sflag, size = 0x8, scoped, tag = 'scoped memory for tpu_custom_call.1']
    #allocation5 [shape = 'u8[32768]{0}', space=vmem, size = 0x8000, scoped, tag = 'input window, operand 1']
    #allocation6 [shape = 's32[2]{0}', space=sflag, size = 0x8, scoped, tag = 'scoped memory for tpu_custom_call.1']
    %7 = vsyncpa [#allocation4], 0
    %s8 = scalar_lea.sflag [#allocation4], 1
    %9 = vsyncpa %s8, 0
    %10 = vsyncpa [#allocation6], 0
    %s11 = scalar_lea.sflag [#allocation6], 1
    %12 = vsyncpa %s11, 0
    loop: start=0, step=1, limit=4
    $region2: #{tpu_custom_call.1} parent=1 // loop_pre_header
      _
    $region3: #{tpu_custom_call.1} parent=1 // loop_header
      %s14 = sphi 0, %s18
      %p15 = scmp.ge.s32.totalorder %s14, 4
      %s21 = sphi 0, %s33
      %s22 = sphi 0, %s29
      %s23 = sphi 0, %s21
      %s24 = sphi 0, %s22
      %s25 = sphi 0, %s23
      %s26 = sphi 0, %s24
      %s38 = sphi 0, %s40
      %s41 = sphi 0, %s38
      %s42 = sphi 0, %s41
      %s58 = sphi 0, %s42
      %s66 = sphi 0, %s68
      %s69 = sphi 0, %s66
      %s70 = sphi 0, %s69
      %s86 = sphi 0, %s70
      %s92 = sphi 0, %s94
      %s95 = sphi 0, %s92
      %s96 = sphi 0, %s95
      %s112 = sphi 0, %s96
    $region4: #{tpu_custom_call.1} parent=1 // loop_header_branch
      %17 = sbr.rel (%p15) target = $region8
    $region5: #{tpu_custom_call.1} parent=1 // loop_body
      %s19 = ssub.s32 %s14, 1
      %s20 = ssub.s32 %s14, 2
      %s27 = sadd.s32 1, %s22
      %p28 = scmp.ge.s32.totalorder %s27, 1
      %s29 = scalar_select %p28, 0, %s27
      %s30 = sadd.s32 1, %s21
      %s31 = scalar_select %p28, %s30, %s21
      %p32 = scmp.ge.s32.totalorder %s31, 2
      %s33 = scalar_select %p32, 0, %s31
      %s34 = ssub.s32 %s21, %s33
      %s35 = ssub.s32 %s22, %s29
      %s36 = sor.u32 %s34, %s35
      %p37 = scmp.eq.s32.totalorder %s36, 0
      %s39 = sadd.s32 %s38, 1
      %s40 = scalar_select %p37, %s38, %s39
      %p43 = pneg %p37
      %p44 = scmp.eq.s32.totalorder %s14, 1
      %p45 = por %p43, %p44
      %p46 = scmp.ne.s32.totalorder %s38, %s41
      %p47 = scmp.eq.s32.totalorder %s14, 0
      %p48 = por %p46, %p47
      %p49 = scmp.ne.s32.totalorder %s38, %s41
      %p50 = scmp.eq.s32.totalorder %s19, 1
      %p51 = por %p49, %p50
      %p52 = scmp.ne.s32.totalorder %s41, %s42
      %p53 = scmp.eq.s32.totalorder %s19, 0
      %p54 = por %p52, %p53
      %p55 = scmp.ne.s32.totalorder %s41, %s42
      %p56 = scmp.eq.s32.totalorder %s20, 1
      %p57 = por %p55, %p56
      %p59 = scmp.ne.s32.totalorder %s42, %s58
      %p60 = scmp.eq.s32.totalorder %s20, 0
      %p61 = por %p59, %p60
      %s62 = ssub.s32 %s21, %s33
      %s63 = ssub.s32 %s22, %s29
      %s64 = sor.u32 %s62, %s63
      %p65 = scmp.eq.s32.totalorder %s64, 0
      %s67 = sadd.s32 %s66, 1
      %s68 = scalar_select %p65, %s66, %s67
      %p71 = pneg %p65
      %p72 = scmp.eq.s32.totalorder %s14, 1
      %p73 = por %p71, %p72
      %p74 = scmp.ne.s32.totalorder %s66, %s69
      %p75 = scmp.eq.s32.totalorder %s14, 0
      %p76 = por %p74, %p75
      %p77 = scmp.ne.s32.totalorder %s66, %s69
      %p78 = scmp.eq.s32.totalorder %s19, 1
      %p79 = por %p77, %p78
      %p80 = scmp.ne.s32.totalorder %s69, %s70
      %p81 = scmp.eq.s32.totalorder %s19, 0
      %p82 = por %p80, %p81
      %p83 = scmp.ne.s32.totalorder %s69, %s70
      %p84 = scmp.eq.s32.totalorder %s20, 1
      %p85 = por %p83, %p84
      %p87 = scmp.ne.s32.totalorder %s70, %s86
      %p88 = scmp.eq.s32.totalorder %s20, 0
      %p89 = por %p87, %p88
      %s90 = ssub.s32 %s21, %s33
      %p91 = scmp.eq.s32.totalorder %s90, 0
      %s93 = sadd.s32 %s92, 1
      %s94 = scalar_select %p91, %s92, %s93
      %p97 = pneg %p91
      %p98 = scmp.eq.s32.totalorder %s14, 1
      %p99 = por %p97, %p98
      %p100 = scmp.ne.s32.totalorder %s92, %s95
      %p101 = scmp.eq.s32.totalorder %s14, 0
      %p102 = por %p100, %p101
      %p103 = scmp.ne.s32.totalorder %s92, %s95
      %p104 = scmp.eq.s32.totalorder %s19, 1
      %p105 = por %p103, %p104
      %p106 = scmp.ne.s32.totalorder %s95, %s96
      %p107 = scmp.eq.s32.totalorder %s19, 0
      %p108 = por %p106, %p107
      %p109 = scmp.ne.s32.totalorder %s95, %s96
      %p110 = scmp.eq.s32.totalorder %s20, 1
      %p111 = por %p109, %p110
      %p113 = scmp.ne.s32.totalorder %s96, %s112
      %p114 = scmp.eq.s32.totalorder %s20, 0
      %p115 = por %p113, %p114
      %p116 = scmp.le.s32.totalorder 1, %s14
      %p117 = scmp.lt.s32.totalorder %s14, 3
      %p118 = pnand %p116, %p117
      %p119 = pneg %p118
      // Predicated region
      $region9: #{tpu_custom_call.1} parent=5 // pred_check
        _
      $region10: #{tpu_custom_call.1} parent=5 // pred_check_branch
        %121 = sbr.rel (%p118) target = $region12
      $region11: #{tpu_custom_call.1} parent=5 // pred_region
        %s122 = ssub.s32 %s14, 1
      $region12: #{tpu_custom_call.1} parent=5 // pred_fallthru
        _
      %p123 = scmp.lt.s32.totalorder %s14, 2
      // Predicated region
      $region13: #{tpu_custom_call.1} parent=5 // pred_check
        %p124 = pneg %p123
      $region14: #{tpu_custom_call.1} parent=5 // pred_check_branch
        %126 = sbr.rel (%p124) target = $region16
      $region15: #{tpu_custom_call.1} parent=5 // pred_region
        // Predicated region
        $region17: #{tpu_custom_call.1} parent=15 // pred_check
          %p127 = pneg %p48
        $region18: #{tpu_custom_call.1} parent=15 // pred_check_branch
          %129 = sbr.rel (%p127) target = $region20
        $region19: #{tpu_custom_call.1} parent=15 // pred_region
          %s130 = sand.u32 %s38, 1
          %s131 = scalar_lea.sflag [#allocation4], %s130
          %s132 = sand.u32 %s38, 1
          %s133 = smul.addr %s132, 32
          %s134 = scalar_lea.vmem [#allocation3], %s133
          %s135 = smul.u32 4, %s21
          %s137 = ssub.s32 512, 512
          %138 = vsyncadd %s131, %s137
          %s139 = sadd.s32 %s22, %s135
          %s140 = smul.addr %s139, 128
          %s141 = scalar_lea.hbm %s0, %s140
          %s142 = sshll.u32 %s134, 4
          %s143 = int_to_ptr.vmem [resolvable:$true] %s142
          %148 = dma.hbm_to_vmem [thread:$0]  %s141, 512, %s143, %s131, 128, 128, 8
        $region20: #{tpu_custom_call.1} parent=15 // pred_fallthru
          _
        // Predicated region
        $region21: #{tpu_custom_call.1} parent=15 // pred_check
          %p149 = pneg %p76
        $region22: #{tpu_custom_call.1} parent=15 // pred_check_branch
          %151 = sbr.rel (%p149) target = $region24
        $region23: #{tpu_custom_call.1} parent=15 // pred_region
          %s152 = sand.u32 %s66, 1
          %s153 = scalar_lea.sflag [#allocation6], %s152
          %s154 = sand.u32 %s66, 1
          %s155 = smul.addr %s154, 32
          %s156 = scalar_lea.vmem [#allocation5], %s155
          %s157 = smul.u32 4, %s21
          %s159 = ssub.s32 512, 512
          %160 = vsyncadd %s153, %s159
          %s161 = sadd.s32 %s22, %s157
          %s162 = smul.addr %s161, 128
          %s163 = scalar_lea.hbm %s1, %s162
          %s164 = sshll.u32 %s156, 4
          %s165 = int_to_ptr.vmem [resolvable:$true] %s164
          %170 = dma.hbm_to_vmem [thread:$0]  %s163, 512, %s165, %s153, 128, 128, 8
        $region24: #{tpu_custom_call.1} parent=15 // pred_fallthru
          _
      $region16: #{tpu_custom_call.1} parent=5 // pred_fallthru
        _
      %p171 = scmp.le.s32.totalorder 1, %s14
      %p172 = scmp.lt.s32.totalorder %s14, 3
      %p173 = pnand %p171, %p172
      %p174 = pneg %p173
      // Predicated region
      $region25: #{tpu_custom_call.1} parent=5 // pred_check
        _
      $region26: #{tpu_custom_call.1} parent=5 // pred_check_branch
        %176 = sbr.rel (%p173) target = $region28
      $region27: #{tpu_custom_call.1} parent=5 // pred_region
        %s177 = ssub.s32 %s14, 1
        %s178 = sand.u32 %s41, 1
        %s179 = scalar_lea.sflag [#allocation4], %s178
        %s180 = sand.u32 %s41, 1
        %s181 = smul.addr %s180, 32
        %s182 = scalar_lea.vmem [#allocation3], %s181
        // Predicated region
        $region29: #{tpu_custom_call.1} parent=27 // pred_check
          %p183 = pneg %p54
        $region30: #{tpu_custom_call.1} parent=27 // pred_check_branch
          %185 = sbr.rel (%p183) target = $region32
        $region31: #{tpu_custom_call.1} parent=27 // pred_region
          %186 = dma.done %s179, 512
        $region32: #{tpu_custom_call.1} parent=27 // pred_fallthru
          _
        %s187 = sand.u32 %s69, 1
        %s188 = scalar_lea.sflag [#allocation6], %s187
        %s189 = sand.u32 %s69, 1
        %s190 = smul.addr %s189, 32
        %s191 = scalar_lea.vmem [#allocation5], %s190
        // Predicated region
        $region33: #{tpu_custom_call.1} parent=27 // pred_check
          %p192 = pneg %p82
        $region34: #{tpu_custom_call.1} parent=27 // pred_check_branch
          %194 = sbr.rel (%p192) target = $region36
        $region35: #{tpu_custom_call.1} parent=27 // pred_region
          %195 = dma.done %s188, 512
        $region36: #{tpu_custom_call.1} parent=27 // pred_fallthru
          _
        %s196 = sand.u32 %s41, 1
        %s197 = scalar_lea.sflag [#allocation4], %s196
        %s198 = sand.u32 %s41, 1
        %s199 = smul.addr %s198, 32
        %s200 = scalar_lea.vmem [#allocation3], %s199
        %p201 = pneg %p54
        %p202 = pneg %p51
        %s203 = sand.u32 %s69, 1
        %s204 = scalar_lea.sflag [#allocation6], %s203
        %s205 = sand.u32 %s69, 1
        %s206 = smul.addr %s205, 32
        %s207 = scalar_lea.vmem [#allocation5], %s206
        %p208 = pneg %p82
        %p209 = pneg %p79
        %p210 = pneg %p108
        %p211 = pneg %p105
        %p212 = scmp.lt.s32.totalorder %s23, 1
        %s213 = scalar_select %p212, %s23, 1
        %s214 = scalar_lea.vmem %s2, %s213
        %s215 = smul.u32 4, %s23
        %s216 = smul.u32 4, %s23
        %p217 = scmp.lt.s32.totalorder %s23, 1
        %s218 = scalar_select %p217, %s23, 1
        %s219 = scalar_lea.vmem %s2, %s218
        %p220 = scmp.eq.s32.totalorder %s24, 0
        // Predicated region
        $region37: #{tpu_custom_call.1} parent=27 // pred_check
          %p221 = pneg %p220
        $region38: #{tpu_custom_call.1} parent=27 // pred_check_branch
          %223 = sbr.rel (%p221) target = $region40
        $region39: #{tpu_custom_call.1} parent=27 // pred_region
          %224 = vst [vmem:[#allocation2] sm:$0xff] 0.0
        $region40: #{tpu_custom_call.1} parent=27 // pred_fallthru
          _
        %v225 = vld [vmem:[%s182] sm:$0xff]
        %v226 = vld [vmem:[%s182 + $0x8] sm:$0xff]
        %v227 = vld [vmem:[%s182 + $0x10] sm:$0xff]
        %v228 = vld [vmem:[%s182 + $0x18] sm:$0xff]
        %v229 = vmax.f32 %v225, 1e-07
        %v230 = vmax.f32 %v226, 1e-07
        %v231 = vmax.f32 %v227, 1e-07
        %v232 = vmax.f32 %v228, 1e-07
        %v233 = vmin.f32 %v229, 0.9999999
        %v234 = vmin.f32 %v230, 0.9999999
        %v235 = vmin.f32 %v231, 0.9999999
        %v236 = vmin.f32 %v232, 0.9999999
        %v237 = vld [vmem:[%s191] sm:$0xff]
        %v238 = vld [vmem:[%s191 + $0x8] sm:$0xff]
        %v239 = vld [vmem:[%s191 + $0x10] sm:$0xff]
        %v240 = vld [vmem:[%s191 + $0x18] sm:$0xff]
        %v241 = vlog2.pop %v233
        %v242 = vmul.f32 %v241, 0.6931472
        %v243 = vlog2.pop %v234
        %v244 = vmul.f32 %v243, 0.6931472
        %v245 = vlog2.pop %v235
        %v246 = vmul.f32 %v245, 0.6931472
        %v247 = vlog2.pop %v236
        %v248 = vmul.f32 %v247, 0.6931472
        %v249 = vmul.f32 %v237, %v242
        %v250 = vmul.f32 %v238, %v244
        %v251 = vmul.f32 %v239, %v246
        %v252 = vmul.f32 %v240, %v248
        %v253 = vld [vmem:[#allocation2] sm:$0xff]
        %v254 = vadd.f32 %v249, %v250
        %v255 = vadd.f32 %v254, %v251
        %v256 = vadd.f32 %v255, %v252
        %v257 = vadd.f32 %v253, %v256
        %258 = vst [vmem:[#allocation2] sm:$0xff] %v257
        // Predicated region
        $region41: #{tpu_custom_call.1} parent=27 // pred_check
          %p259 = pneg %p220
        $region42: #{tpu_custom_call.1} parent=27 // pred_check_branch
          %261 = sbr.rel (%p259) target = $region44
        $region43: #{tpu_custom_call.1} parent=27 // pred_region
          %v262 = vld [vmem:[#allocation2] sm:$0xff]
          %263 = vadd.xlane.f32.xlu0 %v262
          %v264 = vpop.xlane.xlu0 %263
          %v265 = vrot.slane %v264, 4
          %v266 = vadd.f32 %v264, %v265
          %v267 = vrot.slane %v266, 2
          %v268 = vadd.f32 %v266, %v267
          %v269 = vrot.slane %v268, 1
          %v270 = vadd.f32 %v268, %v269
          %vm271 = vcmask 0
          %272 = vst.msk [vmem:[%s219] sm:$0x1] %vm271, %v270
        $region44: #{tpu_custom_call.1} parent=27 // pred_fallthru
          _
        %p273 = scmp.lt.s32.totalorder %s23, 1
        %s274 = scalar_select %p273, %s23, 1
        %s275 = scalar_lea.vmem %s2, %s274
        // Predicated region
        $region45: #{tpu_custom_call.1} parent=27 // pred_check
          %p276 = pneg %p105
        $region46: #{tpu_custom_call.1} parent=27 // pred_check_branch
          %278 = sbr.rel (%p276) target = $region48
        $region47: #{tpu_custom_call.1} parent=27 // pred_region
          _
        $region48: #{tpu_custom_call.1} parent=27 // pred_fallthru
          _
      $region28: #{tpu_custom_call.1} parent=5 // pred_fallthru
        _
      %p279 = scmp.le.s32.totalorder 2, %s14
      // Predicated region
      $region49: #{tpu_custom_call.1} parent=5 // pred_check
        %p280 = pneg %p279
      $region50: #{tpu_custom_call.1} parent=5 // pred_check_branch
        %282 = sbr.rel (%p280) target = $region52
      $region51: #{tpu_custom_call.1} parent=5 // pred_region
        %s283 = ssub.s32 %s14, 2
        // Predicated region
        $region53: #{tpu_custom_call.1} parent=51 // pred_check
          %p284 = pneg %p111
        $region54: #{tpu_custom_call.1} parent=51 // pred_check_branch
          %286 = sbr.rel (%p284) target = $region56
        $region55: #{tpu_custom_call.1} parent=51 // pred_region
          %p287 = scmp.lt.s32.totalorder %s25, 1
          %s288 = scalar_select %p287, %s25, 1
          %s289 = scalar_lea.vmem %s2, %s288
        $region56: #{tpu_custom_call.1} parent=51 // pred_fallthru
          _
      $region52: #{tpu_custom_call.1} parent=5 // pred_fallthru
        _
    $region6: #{tpu_custom_call.1} parent=1 // loop_footer
      %s18 = sadd.s32 1, %s14
    $region7: #{tpu_custom_call.1} parent=1 // loop_footer_branch
      %13 = sbr.rel target = $region3
    $region8: #{tpu_custom_call.1} parent=1 // loop_exit
      _
    %290 = vsyncpa [#allocation4], 1
    %s291 = scalar_lea.sflag [#allocation4], 1
    %292 = vsyncpa %s291, 1
    %293 = vsyncpa [#allocation6], 1
    %s294 = scalar_lea.sflag [#allocation6], 1
    %295 = vsyncpa %s294, 1

</llo_original>
